<compile_context>
chip_gen: v7x
topology: tpu7x:2x2x1
jax: 0.10.0
libtpu: 0.0.40
codegen_flags: <defaults>
</compile_context>

<pallas_src>
import math
import numpy as np
import jax
import jax.numpy as jnp
from jax.experimental import pallas as pl
from jax.experimental.pallas import tpu as pltpu


# ----------------------------- Pallas kernel --------------------------------
def _copy_kernel(x_ref, o_ref):
    # Lane-dense identity copy of the current tile.
    o_ref[...] = x_ref[...]


_LANE = 128
_SUBLANE = 8
_MAX_LANE = 4096                      # target lane width for big inputs
_MAX_BLOCK_BYTES = 2 * 1024 * 1024    # per-block cap: 2 MiB -> (in+out)x2buf = 8 MiB,
                                      # safe under v5e's 16 MiB default scoped VMEM


def _dense_2d_factorization(total):
    """(rows, lane) with rows*lane == total, lane % 128 == 0, rows % 8 == 0, or None."""
    lane = min(_MAX_LANE, (total // _LANE) * _LANE)
    while lane >= _LANE:
        if total % lane == 0 and (total // lane) % _SUBLANE == 0:
            return total // lane, lane
        lane -= _LANE
    return None


def linear_project_forward(x):
    """JAX/Pallas equivalent of LinearProject.forward (the executed path)."""
    b, l, d = x.shape
    hw = math.isqrt(l * 8)                        # exact integer sqrt (review fix)
    if hw * hw != l * 8:
        raise ValueError("l * 8 must be a perfect square (required by the reshape)")
    flat = l * d
    if flat % (hw * hw) != 0:
        raise ValueError("cannot reshape: L*D must be divisible by 8*L (i.e. D % 8 == 0)")
    c_out = flat // (hw * hw)                     # == d // 8

    total = b * flat
    itemsize = jnp.dtype(x.dtype).itemsize
    fac = _dense_2d_factorization(total)

    if fac is not None:
        rows, lane = fac
        # Largest multiple-of-8 row count whose block stays under the byte cap.
        max_rows = max(_SUBLANE,
                       (_MAX_BLOCK_BYTES // (lane * itemsize)) // _SUBLANE * _SUBLANE)
        block_rows = min(rows, max_rows)
        grid = (pl.cdiv(rows, block_rows),)

        x2d = x.reshape(rows, lane)               # metadata-only, row-major
        out2d = pl.pallas_call(
            _copy_kernel,
            out_shape=jax.ShapeDtypeStruct((rows, lane), x.dtype),
            grid_spec=pl.GridSpec(
                grid=grid,
                in_specs=[pl.BlockSpec((block_rows, lane), lambda i: (i, 0))],
                out_specs=pl.BlockSpec((block_rows, lane), lambda i: (i, 0)),
            ),
            compiler_params=pltpu.CompilerParams(
                dimension_semantics=("parallel",)),   # copy has no reduction axis
            input_output_aliases={0: 0},              # let XLA reuse the input buffer
        )(x2d)
    else:
        # Fallback for shapes whose element count is not a multiple of 8*128:
        # one full-array block (exempt from the (8,128) divisibility rule).
        x2d = x.reshape(b, flat)
        out2d = pl.pallas_call(
            _copy_kernel,
            out_shape=jax.ShapeDtypeStruct((b, flat), x.dtype),
            grid_spec=pl.GridSpec(
                grid=(1,),
                in_specs=[pl.BlockSpec((b, flat), lambda i: (0, 0))],
                out_specs=pl.BlockSpec((b, flat), lambda i: (0, 0)),
            ),
            compiler_params=pltpu.CompilerParams(
                dimension_semantics=("arbitrary",)),
            input_output_aliases={0: 0},
        )(x2d)

    # Row-major un-flatten to the PyTorch output shape (metadata only).
    return out2d.reshape(b, c_out, hw, hw)


# --------------------------- pure-JAX reference -------------------------------
def reference_forward(x):
    b, l, d = x.shape
    hw = math.isqrt(l * 8)
    return jnp.reshape(x, (b, -1, hw, hw))


# --------------------------------- main ---------------------------------------
if __name__ == "__main__":
    # (B, L, D) with 8*L a perfect square and D divisible by 8.
    # B=2, L=32, D=32 -> output (2, 4, 16, 16).
    batch, l_dim, d_dim = 2, 32, 32
    key = jax.random.PRNGKey(0)
    x = jax.random.normal(key, (batch, l_dim, d_dim), dtype=jnp.float32)

    y_ref = reference_forward(x)

    y = linear_project_forward(x)
    y = jax.block_until_ready(y)

    assert y.shape == (batch, d_dim // 8, 16, 16), y.shape
    np.testing.assert_allclose(np.asarray(y), np.asarray(y_ref), rtol=0, atol=0)
    print("KERNEL_OK")
</pallas_src>

<mosaic_0001>
module attributes {stable_mosaic.version = 11 : i64} {
  func.func @_copy_kernel(%arg0: i32, %arg1: memref<8x256xf32, #tpu.memory_space<vmem>>, %arg2: memref<8x256xf32, #tpu.memory_space<vmem>>) attributes {dimension_semantics = [#tpu.dimension_semantics<parallel>], iteration_bounds = array<i64: 1>, scalar_prefetch = 0 : i64, scratch_operands = 0 : i64, tpu.core_type = #tpu.core_type<tc>, window_params = [{transform_indices = @transform_0, window_bounds = array<i64: 8, 256>}, {transform_indices = @transform_1, window_bounds = array<i64: 8, 256>}]} {
    %c0 = arith.constant 0 : index
    %c0_0 = arith.constant 0 : index
    %0 = vector.load %arg1[%c0, %c0_0] : memref<8x256xf32, #tpu.memory_space<vmem>>, vector<8x256xf32>
    %c0_1 = arith.constant 0 : index
    %c0_2 = arith.constant 0 : index
    %1 = vector.load %arg2[%c0_1, %c0_2] : memref<8x256xf32, #tpu.memory_space<vmem>>, vector<8x256xf32>
    tpu.vector_store %arg2[%c0_1, %c0_2], %0 {strides = array<i32>} : memref<8x256xf32, #tpu.memory_space<vmem>>, vector<8x256xf32>,
    return
  }
  func.func @transform_0(%arg0: i32) -> (i32, i32) {
    %c0_i32 = arith.constant 0 : i32
    %c0_i32_0 = arith.constant 0 : i32
    return %arg0, %c0_i32 : i32, i32
  }
  func.func @transform_1(%arg0: i32) -> (i32, i32) {
    %c0_i32 = arith.constant 0 : i32
    %c0_i32_0 = arith.constant 0 : i32
    return %arg0, %c0_i32 : i32, i32
  }
}

</mosaic_0001>

<llo_original>
// kernel: tpu_custom_call.1
$region0: #{tpu_custom_call.1}
  #allocation0 [shape = 'u32[]', space=smem, size = 0x4, offset = 0x4, fixed_abs, tag = 'smem constant byte address 0x4 - core index']
  #allocation1 [shape = 'u32[144,128]{1,0:T(1,128)}', space=vmem, size = 0x12000, scoped, tag = 'internal scratch']
  %s0 = inlined_call_operand.hbm [shape: f32[8,256], index: 0, kind: input, shape index: {}, may-alias: {0,1}]
  %s1 = inlined_call_operand.hbm [shape: f32[8,256], index: 1, kind: output, shape index: {}, may-alias: {0,1}]
  %s2 = sld [smem:[#allocation0]]
  $region18: #{tpu_custom_call.1} parent=0
    _
  %s4 = ssub.s32 1, %s2
  %s5 = scalar_select 0, %s4, %s2
  $region1: #{tpu_custom_call.1} parent=0
    #allocation2 [shape = 'u8[8192]{0}', space=vmem, size = 0x2000, scoped, tag = 'input window, operand 0, single buffered']
    #allocation3 [shape = 's32[1]{0}', space=sflag, size = 0x4, scoped, tag = 'scoped memory for tpu_custom_call.1']
    #allocation4 [shape = 's32[1]{0}', space=sflag, size = 0x4, scoped, tag = 'scoped memory for tpu_custom_call.1']
    #allocation5 [shape = 'u8[8192]{0}', space=vmem, size = 0x2000, scoped, tag = 'output window, operand 0, single buffered']
    %6 = vsyncpa [#allocation3], 0
    %7 = vsyncpa [#allocation4], 0
    // Predicated region
    $region2: #{tpu_custom_call.1} parent=1 // pred_check
      _
    $region3: #{tpu_custom_call.1} parent=1 // pred_check_branch
      %9 = sbr.rel (0) target = $region5
    $region4: #{tpu_custom_call.1} parent=1 // pred_region
      %s11 = ssub.s32 256, 256
      %12 = vsyncadd [#allocation3], %s11
      %s14 = sshll.u32 [#allocation2], 4
      %s15 = int_to_ptr.vmem [resolvable:$true] %s14
      %17 = dma.hbm_to_vmem [thread:$0]  %s0, 256, %s15, [#allocation3]
    $region5: #{tpu_custom_call.1} parent=1 // pred_fallthru
      _
    // Predicated region
    $region6: #{tpu_custom_call.1} parent=1 // pred_check
      _
    $region7: #{tpu_custom_call.1} parent=1 // pred_check_branch
      %19 = sbr.rel (0) target = $region9
    $region8: #{tpu_custom_call.1} parent=1 // pred_region
      %20 = dma.done [#allocation3], 256
    $region9: #{tpu_custom_call.1} parent=1 // pred_fallthru
      _
    %v21 = vld [vmem:[#allocation2] sm:$0xff]
    %v22 = vld [vmem:[#allocation2 + $0x8] sm:$0xff]
    %23 = vst [vmem:[#allocation5] sm:$0xff] %v21
    %24 = vst [vmem:[#allocation5 + $0x8] sm:$0xff] %v22
    // Predicated region
    $region10: #{tpu_custom_call.1} parent=1 // pred_check
      _
    $region11: #{tpu_custom_call.1} parent=1 // pred_check_branch
      %26 = sbr.rel (0) target = $region13
    $region12: #{tpu_custom_call.1} parent=1 // pred_region
      %s28 = ssub.s32 256, 256
      %29 = vsyncadd [#allocation4], %s28
      %s31 = sshll.u32 [#allocation5], 4
      %s32 = int_to_ptr.vmem [resolvable:$true] %s31
      %34 = dma.vmem_to_hbm [thread:$0]  %s32, 256, %s1, [#allocation4]
    $region13: #{tpu_custom_call.1} parent=1 // pred_fallthru
      _
    // Predicated region
    $region14: #{tpu_custom_call.1} parent=1 // pred_check
      _
    $region15: #{tpu_custom_call.1} parent=1 // pred_check_branch
      %36 = sbr.rel (0) target = $region17
    $region16: #{tpu_custom_call.1} parent=1 // pred_region
      %37 = dma.done [#allocation4], 256
    $region17: #{tpu_custom_call.1} parent=1 // pred_fallthru
      _
    %38 = vsyncpa [#allocation3], 1
    %39 = vsyncpa [#allocation4], 1

</llo_original>
